<compile_context>
chip_gen: v6e
topology: v6e:2x2x1
jax: 0.10.0
libtpu: 0.0.40
codegen_flags: <defaults>
</compile_context>

<pallas_src>
import functools
import math

import jax
import jax.numpy as jnp
from jax.experimental import pallas as pl
from jax.experimental.pallas import tpu as pltpu


def _round_up(v, m):
    return (v + m - 1) // m * m


def _readout_kernel(x_ref, mask_ref, atw_ref, ab_ref, ew_ref, eb_ref, o_ref,
                    *, tb, n, mxu_dtype):
    d = x_ref.shape[-1]
    dp = ew_ref.shape[-1]

    # Free re-views (n is a sublane multiple).
    x2 = x_ref[...].reshape(tb * n, d)                       # (tb*N, D) f32
    mask2 = mask_ref[...].reshape(tb * n, 1)                 # (tb*N, 1) f32

    # emb = relu(x @ emb_w + emb_b): one MXU matmul for the whole batch tile.
    # bf16 operands, f32 accumulation (pass mxu_dtype=f32 for exact numerics).
    emb = jnp.dot(x2.astype(mxu_dtype), ew_ref[...].astype(mxu_dtype),
                  preferred_element_type=jnp.float32)        # (tb*N, Dp) f32
    emb = jnp.maximum(emb + eb_ref[...], 0.0)

    # att = sigmoid(<x, att_w> + att_b): VPU multiply + lane (XLU) reduction,
    # kept entirely in f32.
    att_logits = jnp.sum(x2 * atw_ref[...], axis=-1, keepdims=True)
    att = jax.nn.sigmoid(att_logits + ab_ref[0, 0])          # (tb*N, 1)

    g = mask2 * att * emb                                    # (tb*N, Dp) f32
    gm = g + (mask2 - 1.0) * 1.0e9                           # masked rows -> -1e9

    g3 = g.reshape(tb, n, dp)
    gm3 = gm.reshape(tb, n, dp)

    n_cnt = jnp.sum(mask_ref[...], axis=1)                   # (tb, 1)
    # Reciprocal on the (tb,1) vector + one broadcast mul instead of a full
    # (tb, Dp) divide.  Empty graphs give NaN, same as the PyTorch reference;
    # padded batch rows are discarded by the wrapper.
    g_mean = jnp.sum(g3, axis=1) * (1.0 / n_cnt)             # (tb, Dp)
    g_max = jnp.max(gm3, axis=1)                             # (tb, Dp)

    o_ref[...] = (g_mean + g_max).astype(o_ref.dtype)        # lane-dense slab


def readout_layer(x, mask, att_w, att_b, emb_w, emb_b, *,
                  batch_tile=None, mxu_dtype=jnp.bfloat16):
    """x: (B, N, D), mask: (B, N, 1) -> (B, D) f32."""
    B, N, D = x.shape
    f32 = jnp.float32
    Dp = _round_up(D, 128)

    x = x.astype(f32)
    mask = mask.astype(f32).reshape(B, N, 1)

    # Pad N to a sublane multiple only if needed so the in-kernel reshape is a
    # free re-view; padded node rows carry mask == 0 and contribute nothing.
    Np = _round_up(N, 8)
    if Np != N:
        x = jnp.pad(x, ((0, 0), (0, Np - N), (0, 0)))
        mask = jnp.pad(mask, ((0, 0), (0, Np - N), (0, 0)))
        N = Np

    # --- batch tiling --------------------------------------------------------
    if batch_tile is None:
        # >=512 MXU rows per step; VMEM cap counts 2 double-buffered x blocks
        # plus ~4 f32 (tb*N, Dp) temporaries -> ~6 block-equivalents live.
        tb = _round_up(pl.cdiv(512, N), 8)
        per_row = N * Dp * 4                       # one batch row, f32 @ Dp width
        live_budget = 24 * 1024 * 1024             # working-set target, all gens
        tb_cap = max(8, (live_budget // (6 * per_row)) // 8 * 8)
        tb = min(tb, tb_cap)
        if B >= 16:
            # Keep >=2 grid steps so v7x's two TCs / DMA pipeline are engaged.
            tb = min(tb, _round_up(pl.cdiv(B, 2), 8))
        if B < tb:
            tb = B                                  # tiny batch: block == array
    else:
        tb = batch_tile

    Bp = _round_up(B, tb)
    if Bp != B:
        # Batch-remainder padding only (no feature padding of x); padded rows
        # have mask == 0 and are sliced off below.
        x = jnp.pad(x, ((0, Bp - B), (0, 0), (0, 0)))
        mask = jnp.pad(mask, ((0, Bp - B), (0, 0), (0, 0)))

    # Only the small operands get feature padding -> lane-dense MXU columns and
    # an unmasked, lane-dense output store.
    atw = att_w.astype(f32).reshape(1, D)
    ab_sc = att_b.astype(f32).reshape(1, 1)
    ew = jnp.pad(emb_w.astype(f32), ((0, 0), (0, Dp - D)))
    eb = jnp.pad(emb_b.astype(f32).reshape(1, D), ((0, 0), (0, Dp - D)))

    kernel = functools.partial(_readout_kernel, tb=tb, n=N, mxu_dtype=mxu_dtype)

    out = pl.pallas_call(
        kernel,
        out_shape=jax.ShapeDtypeStruct((Bp, Dp), f32),
        grid_spec=pltpu.PrefetchScalarGridSpec(
            num_scalar_prefetch=0,
            grid=(Bp // tb,),
            in_specs=[
                pl.BlockSpec((tb, N, D), lambda b: (b, 0, 0)),       # x (unpadded D)
                pl.BlockSpec((tb, N, 1), lambda b: (b, 0, 0)),       # mask
                pl.BlockSpec((1, D), lambda b: (0, 0)),              # att_w^T
                pl.BlockSpec(memory_space=pltpu.MemorySpace.SMEM),   # att_b scalar
                pl.BlockSpec((D, Dp), lambda b: (0, 0)),             # emb_w
                pl.BlockSpec((1, Dp), lambda b: (0, 0)),             # emb_b
            ],
            out_specs=pl.BlockSpec((tb, Dp), lambda b: (b, 0)),
        ),
        compiler_params=pltpu.CompilerParams(
            dimension_semantics=("parallel",),
            vmem_limit_bytes=48 * 1024 * 1024),
    )(x, mask, atw, ab_sc, ew, eb)

    # Drop batch padding (mask==0 rows) and feature padding columns.
    return out[:B, :D]


def _glorot(key, in_dim, out_dim):
    limit = math.sqrt(6.0 / (in_dim + out_dim))
    return jax.random.uniform(key, (in_dim, out_dim), jnp.float32, -limit, limit)


def _uniform_bias(key, fan_in, out_dim):
    bound = 1.0 / math.sqrt(fan_in)
    return jax.random.uniform(key, (out_dim,), jnp.float32, -bound, bound)


def _reference(x, mask, att_w, att_b, emb_w, emb_b):
    att = jax.nn.sigmoid(jnp.einsum("bnd,do->bno", x, att_w) + att_b)
    emb = jnp.maximum(jnp.einsum("bnd,de->bne", x, emb_w) + emb_b, 0.0)
    n_cnt = jnp.sum(mask, axis=1)                 # (B, 1)
    big_m = (mask - 1.0) * 1.0e9
    g = mask * att * emb
    return jnp.sum(g, axis=1) / n_cnt + jnp.max(g + big_m, axis=1)


if __name__ == "__main__":
    B, N, D = 2, 8, 32          # batch, nodes per graph, input_dim
    OUT_DIM = 16                # output_dim (mlp params exist but unused in forward)

    key = jax.random.PRNGKey(0)
    kx, k1, k2, k3, k4, k5, k6 = jax.random.split(key, 7)

    x = jax.random.normal(kx, (B, N, D), jnp.float32)
    # valid-node mask: first graph has 6 valid nodes, second has 4
    node_valid = jnp.array([[1] * 6 + [0] * 2, [1] * 4 + [0] * 4], jnp.float32)
    mask = node_valid[:, :, None]                                  # (B, N, 1)

    att_w = _glorot(k1, D, 1)
    emb_w = _glorot(k2, D, D)
    att_b = _uniform_bias(k3, D, 1)
    emb_b = _uniform_bias(k4, D, D)
    # Unused-in-forward parameters (kept for shape fidelity with __init__):
    mlp_w = _glorot(k5, D, OUT_DIM)
    mlp_b = _uniform_bias(k6, D, OUT_DIM)

    ref = _reference(x, mask, att_w, att_b, emb_w, emb_b)

    # Exact-numerics path (f32 MXU operands) -- bit-faithful to the module.
    out_f32 = jax.block_until_ready(
        readout_layer(x, mask, att_w, att_b, emb_w, emb_b,
                      mxu_dtype=jnp.float32))
    assert out_f32.shape == (B, D)
    assert jnp.allclose(out_f32, ref, atol=1e-4, rtol=1e-4), "f32 path mismatch"

    # Fast default path (bf16 MXU operands, f32 accumulation/reductions).
    out_bf16 = jax.block_until_ready(
        readout_layer(x, mask, att_w, att_b, emb_w, emb_b))
    assert out_bf16.shape == (B, D)
    assert jnp.allclose(out_bf16, ref, atol=7e-2, rtol=7e-2), "bf16 path mismatch"

    print("KERNEL_OK")
</pallas_src>

<mosaic_0001>
module attributes {stable_mosaic.version = 11 : i64} {
  func.func @_readout_kernel(%arg0: i32, %arg1: memref<2x8x32xf32, #tpu.memory_space<vmem>>, %arg2: memref<2x8x1xf32, #tpu.memory_space<vmem>>, %arg3: memref<1x32xf32, #tpu.memory_space<vmem>>, %arg4: memref<1x1xf32, #tpu.memory_space<smem>>, %arg5: memref<32x128xf32, #tpu.memory_space<vmem>>, %arg6: memref<1x128xf32, #tpu.memory_space<vmem>>, %arg7: memref<2x128xf32, #tpu.memory_space<vmem>>) attributes {dimension_semantics = [#tpu.dimension_semantics<parallel>], iteration_bounds = array<i64: 1>, scalar_prefetch = 0 : i64, scratch_operands = 0 : i64, tpu.core_type = #tpu.core_type<tc>, window_params = [{transform_indices = @transform_0, window_bounds = array<i64: 2, 8, 32>}, {transform_indices = @transform_1, window_bounds = array<i64: 2, 8, 1>}, {pipeline_mode = #tpu.pipeline_mode<synchronous>, transform_indices = @transform_2, window_bounds = array<i64: 1, 32>}, {transform_indices = @transform_3, window_bounds = array<i64: 1, 1>}, {pipeline_mode = #tpu.pipeline_mode<synchronous>, transform_indices = @transform_4, window_bounds = array<i64: 32, 128>}, {pipeline_mode = #tpu.pipeline_mode<synchronous>, transform_indices = @transform_5, window_bounds = array<i64: 1, 128>}, {transform_indices = @transform_6, window_bounds = array<i64: 2, 128>}]} {
    %c0 = arith.constant 0 : index
    %c0_0 = arith.constant 0 : index
    %c0_1 = arith.constant 0 : index
    %0 = vector.load %arg1[%c0, %c0_0, %c0_1] : memref<2x8x32xf32, #tpu.memory_space<vmem>>, vector<2x8x32xf32>
    %1 = vector.shape_cast %0 : vector<2x8x32xf32> to vector<16x32xf32>
    %c0_2 = arith.constant 0 : index
    %c0_3 = arith.constant 0 : index
    %c0_4 = arith.constant 0 : index
    %2 = vector.load %arg2[%c0_2, %c0_3, %c0_4] : memref<2x8x1xf32, #tpu.memory_space<vmem>>, vector<2x8x1xf32>
    %3 = vector.shape_cast %2 : vector<2x8x1xf32> to vector<16x1xf32>
    %c0_5 = arith.constant 0 : index
    %c0_6 = arith.constant 0 : index
    %4 = vector.load %arg5[%c0_5, %c0_6] : memref<32x128xf32, #tpu.memory_space<vmem>>, vector<32x128xf32>
    %cst = arith.constant dense<0.000000e+00> : vector<16x128xf32>
    %5 = tpu.matmul %1, %4, %cst {dimension_numbers = #tpu.dot_dimension_numbers<[1], [0], [0], [1], [0, 0, 1, 1], [], []>} : vector<16x32xf32>, vector<32x128xf32>, vector<16x128xf32> -> vector<16x128xf32>
    %c0_7 = arith.constant 0 : index
    %c0_8 = arith.constant 0 : index
    %6 = vector.load %arg6[%c0_7, %c0_8] : memref<1x128xf32, #tpu.memory_space<vmem>>, vector<1x128xf32>
    %7 = vector.broadcast %6 : vector<1x128xf32> to vector<16x128xf32>
    %8 = arith.addf %5, %7 : vector<16x128xf32>
    %cst_9 = arith.constant 0.000000e+00 : f32
    %9 = vector.broadcast %cst_9 : f32 to vector<16x128xf32>
    %10 = arith.maximumf %8, %9 : vector<16x128xf32>
    %c0_10 = arith.constant 0 : index
    %c0_11 = arith.constant 0 : index
    %11 = vector.load %arg3[%c0_10, %c0_11] : memref<1x32xf32, #tpu.memory_space<vmem>>, vector<1x32xf32>
    %12 = vector.broadcast %11 : vector<1x32xf32> to vector<16x32xf32>
    %13 = arith.mulf %1, %12 : vector<16x32xf32>
    %cst_12 = arith.constant dense<0.000000e+00> : vector<16xf32>
    %14 = vector.multi_reduction <add>, %13, %cst_12 [1] : vector<16x32xf32> to vector<16xf32>
    %15 = vector.shape_cast %14 : vector<16xf32> to vector<16x1xf32>
    %c0_13 = arith.constant 0 : index
    %c0_14 = arith.constant 0 : index
    %16 = memref.load %arg4[%c0_13, %c0_14] : memref<1x1xf32, #tpu.memory_space<smem>>
    %17 = vector.broadcast %16 : f32 to vector<16x1xf32>
    %18 = arith.addf %15, %17 : vector<16x1xf32>
    %19 = arith.negf %18 : vector<16x1xf32>
    %20 = math.exp %19 : vector<16x1xf32>
    %cst_15 = arith.constant 1.000000e+00 : f32
    %21 = vector.broadcast %cst_15 : f32 to vector<16x1xf32>
    %22 = arith.addf %21, %20 : vector<16x1xf32>
    %23 = arith.divf %21, %22 : vector<16x1xf32>
    %24 = arith.mulf %3, %23 : vector<16x1xf32>
    %25 = vector.broadcast %24 : vector<16x1xf32> to vector<16x128xf32>
    %26 = arith.mulf %25, %10 : vector<16x128xf32>
    %cst_16 = arith.constant 1.000000e+00 : f32
    %27 = vector.broadcast %cst_16 : f32 to vector<16x1xf32>
    %28 = arith.subf %3, %27 : vector<16x1xf32>
    %cst_17 = arith.constant 1.000000e+09 : f32
    %29 = vector.broadcast %cst_17 : f32 to vector<16x1xf32>
    %30 = arith.mulf %28, %29 : vector<16x1xf32>
    %31 = vector.broadcast %30 : vector<16x1xf32> to vector<16x128xf32>
    %32 = arith.addf %26, %31 : vector<16x128xf32>
    %33 = vector.shape_cast %26 : vector<16x128xf32> to vector<2x8x128xf32>
    %34 = vector.shape_cast %32 : vector<16x128xf32> to vector<2x8x128xf32>
    %c0_18 = arith.constant 0 : index
    %c0_19 = arith.constant 0 : index
    %c0_20 = arith.constant 0 : index
    %35 = vector.load %arg2[%c0_18, %c0_19, %c0_20] : memref<2x8x1xf32, #tpu.memory_space<vmem>>, vector<2x8x1xf32>
    %cst_21 = arith.constant dense<0.000000e+00> : vector<2x1xf32>
    %36 = vector.multi_reduction <add>, %35, %cst_21 [1] : vector<2x8x1xf32> to vector<2x1xf32>
    %cst_22 = arith.constant dense<0.000000e+00> : vector<2x128xf32>
    %37 = vector.multi_reduction <add>, %33, %cst_22 [1] : vector<2x8x128xf32> to vector<2x128xf32>
    %cst_23 = arith.constant 1.000000e+00 : f32
    %38 = vector.broadcast %cst_23 : f32 to vector<2x1xf32>
    %39 = arith.divf %38, %36 : vector<2x1xf32>
    %40 = vector.broadcast %39 : vector<2x1xf32> to vector<2x128xf32>
    %41 = arith.mulf %37, %40 : vector<2x128xf32>
    %cst_24 = arith.constant dense<0xFF800000> : vector<2x128xf32>
    %42 = vector.multi_reduction <maximumf>, %34, %cst_24 [1] : vector<2x8x128xf32> to vector<2x128xf32>
    %43 = arith.addf %41, %42 : vector<2x128xf32>
    %c0_25 = arith.constant 0 : index
    %c0_26 = arith.constant 0 : index
    %44 = vector.load %arg7[%c0_25, %c0_26] : memref<2x128xf32, #tpu.memory_space<vmem>>, vector<2x128xf32>
    tpu.vector_store %arg7[%c0_25, %c0_26], %43 {strides = array<i32>} : memref<2x128xf32, #tpu.memory_space<vmem>>, vector<2x128xf32>,
    return
  }
  func.func @transform_0(%arg0: i32) -> (i32, i32, i32) {
    %c0_i32 = arith.constant 0 : i32
    %c0_i32_0 = arith.constant 0 : i32
    %c0_i32_1 = arith.constant 0 : i32
    return %arg0, %c0_i32, %c0_i32_0 : i32, i32, i32
  }
  func.func @transform_1(%arg0: i32) -> (i32, i32, i32) {
    %c0_i32 = arith.constant 0 : i32
    %c0_i32_0 = arith.constant 0 : i32
    %c0_i32_1 = arith.constant 0 : i32
    return %arg0, %c0_i32, %c0_i32_0 : i32, i32, i32
  }
  func.func @transform_2(%arg0: i32) -> (i32, i32) {
    %c0_i32 = arith.constant 0 : i32
    %c0_i32_0 = arith.constant 0 : i32
    %c0_i32_1 = arith.constant 0 : i32
    return %c0_i32, %c0_i32_0 : i32, i32
  }
  func.func @transform_3(%arg0: i32) -> (i32, i32) {
    %c0_i32 = arith.constant 0 : i32
    %c0_i32_0 = arith.constant 0 : i32
    %c0_i32_1 = arith.constant 0 : i32
    return %c0_i32, %c0_i32_0 : i32, i32
  }
  func.func @transform_4(%arg0: i32) -> (i32, i32) {
    %c0_i32 = arith.constant 0 : i32
    %c0_i32_0 = arith.constant 0 : i32
    %c0_i32_1 = arith.constant 0 : i32
    return %c0_i32, %c0_i32_0 : i32, i32
  }
  func.func @transform_5(%arg0: i32) -> (i32, i32) {
    %c0_i32 = arith.constant 0 : i32
    %c0_i32_0 = arith.constant 0 : i32
    %c0_i32_1 = arith.constant 0 : i32
    return %c0_i32, %c0_i32_0 : i32, i32
  }
  func.func @transform_6(%arg0: i32) -> (i32, i32) {
    %c0_i32 = arith.constant 0 : i32
    %c0_i32_0 = arith.constant 0 : i32
    return %arg0, %c0_i32 : i32, i32
  }
}

</mosaic_0001>

<llo_original>
// kernel: tpu_custom_call.1
$region0: #{tpu_custom_call.1}
  #allocation0 [shape = 'u32[]', space=smem, size = 0x4, offset = 0x4, fixed_abs, tag = 'smem constant byte address 0x4 - core index']
  #allocation1 [shape = 'u32[144,128]{1,0:T(1,128)}', space=vmem, size = 0x12000, scoped, tag = 'internal scratch']
  #allocation2 [shape = 'f32[1,1]{1,0:T(1,128)S(6)}', space=smem, size = 0x200, scoped, tag = 'scoped memory for tpu_custom_call.1']
  %s0 = inlined_call_operand.vmem [shape: f32[2,8,32], index: 0, kind: input, shape index: {}]
  %s1 = inlined_call_operand.vmem [shape: f32[2,8,1], index: 1, kind: input, shape index: {}]
  %s2 = inlined_call_operand.vmem [shape: f32[1,32], index: 2, kind: input, shape index: {}]
  %s3 = inlined_call_operand.<no memory space> [shape: f32[1,1], index: 3, kind: input, shape index: {}]
  %s4 = inlined_call_operand.hbm [shape: f32[32,128], index: 4, kind: input, shape index: {}]
  %s5 = inlined_call_operand.vmem [shape: f32[1,128], index: 5, kind: input, shape index: {}]
  %s6 = inlined_call_operand.hbm [shape: f32[2,128], index: 6, kind: output, shape index: {}]
  %s7 = sld [smem:[#allocation0]]
  $region38: #{tpu_custom_call.1} parent=0
    _
  %s9 = ssub.s32 1, %s7
  %s10 = scalar_select 0, %s9, %s7
  %11 = sst [smem:[#allocation2]] %s3
  $region1: #{tpu_custom_call.1} parent=0
    #allocation3 [shape = 'u8[16384]{0}', space=vmem, size = 0x4000, scoped, tag = 'input window, operand 4, single buffered']
    #allocation4 [shape = 's32[1]{0}', space=sflag, size = 0x4, scoped, tag = 'scoped memory for tpu_custom_call.1']
    #allocation5 [shape = 's32[1]{0}', space=sflag, size = 0x4, scoped, tag = 'scoped memory for tpu_custom_call.1']
    #allocation6 [shape = 'u8[1024]{0}', space=vmem, size = 0x400, scoped, tag = 'output window, operand 0, single buffered']
    %12 = vsyncpa [#allocation4], 0
    %13 = vsyncpa [#allocation5], 0
    // Predicated region
    $region2: #{tpu_custom_call.1} parent=1 // pred_check
      _
    $region3: #{tpu_custom_call.1} parent=1 // pred_check_branch
      %15 = sbr.rel (0) target = $region5
    $region4: #{tpu_custom_call.1} parent=1 // pred_region
      _
    $region5: #{tpu_custom_call.1} parent=1 // pred_fallthru
      _
    // Predicated region
    $region6: #{tpu_custom_call.1} parent=1 // pred_check
      _
    $region7: #{tpu_custom_call.1} parent=1 // pred_check_branch
      %17 = sbr.rel (0) target = $region9
    $region8: #{tpu_custom_call.1} parent=1 // pred_region
      _
    $region9: #{tpu_custom_call.1} parent=1 // pred_fallthru
      _
    // Predicated region
    $region10: #{tpu_custom_call.1} parent=1 // pred_check
      _
    $region11: #{tpu_custom_call.1} parent=1 // pred_check_branch
      %19 = sbr.rel (0) target = $region13
    $region12: #{tpu_custom_call.1} parent=1 // pred_region
      _
    $region13: #{tpu_custom_call.1} parent=1 // pred_fallthru
      _
    // Predicated region
    $region14: #{tpu_custom_call.1} parent=1 // pred_check
      _
    $region15: #{tpu_custom_call.1} parent=1 // pred_check_branch
      %21 = sbr.rel (0) target = $region17
    $region16: #{tpu_custom_call.1} parent=1 // pred_region
      _
    $region17: #{tpu_custom_call.1} parent=1 // pred_fallthru
      _
    // Predicated region
    $region18: #{tpu_custom_call.1} parent=1 // pred_check
      _
    $region19: #{tpu_custom_call.1} parent=1 // pred_check_branch
      %23 = sbr.rel (0) target = $region21
    $region20: #{tpu_custom_call.1} parent=1 // pred_region
      %s25 = ssub.s32 512, 512
      %26 = vsyncadd [#allocation4], %s25
      %s27 = sshll.u32 [#allocation3], 4
      %s28 = int_to_ptr.vmem [resolvable:$true] %s27
      %33 = dma.hbm_to_vmem [thread:$0]  %s4, 512, %s28, [#allocation4], 128, 128, 8
    $region21: #{tpu_custom_call.1} parent=1 // pred_fallthru
      _
    // Predicated region
    $region22: #{tpu_custom_call.1} parent=1 // pred_check
      _
    $region23: #{tpu_custom_call.1} parent=1 // pred_check_branch
      %35 = sbr.rel (0) target = $region25
    $region24: #{tpu_custom_call.1} parent=1 // pred_region
      _
    $region25: #{tpu_custom_call.1} parent=1 // pred_fallthru
      _
    // Predicated region
    $region26: #{tpu_custom_call.1} parent=1 // pred_check
      _
    $region27: #{tpu_custom_call.1} parent=1 // pred_check_branch
      %37 = sbr.rel (0) target = $region29
    $region28: #{tpu_custom_call.1} parent=1 // pred_region
      %38 = dma.done [#allocation4], 512
    $region29: #{tpu_custom_call.1} parent=1 // pred_fallthru
      _
    %v39 = vld [vmem:[%s0] sm:$0xff]
    %v40 = vld [vmem:[%s0 + $0x8] sm:$0xff]
    %v41 = vld [vmem:[%s1] sm:$0xff]
    %v42 = vld [vmem:[%s1 + $0x8] sm:$0xff]
    %v43 = vld [vmem:[#allocation3] sm:$0xff]
    %v44 = vld [vmem:[#allocation3 + $0x8] sm:$0xff]
    %v45 = vld [vmem:[#allocation3 + $0x10] sm:$0xff]
    %v46 = vld [vmem:[#allocation3 + $0x18] sm:$0xff]
    %v47 = vld [vmem:[%s5] sm:$0x1]
    %v49 = vlaneseq
    %v50 = vshrl.u32 %v49, 7
    %v51 = vsub.s32 0, %v50
    %v52 = vrot.slane %v47, %v51
    %vm54 = vcmask 261120
    %v56 = vsel %vm54, %v39, 0
    %v59 = vsel %vm54, %v40, 0
    %61 = vmatprep.subr.mxu0 0.0
    %62 = vmatpush1.msra.mxu0 0.0
    %63 = vmatprep.subr.mxu0 0.0
    %64 = vmatpush1.msra.mxu0 0.0
    %65 = vmatprep.subr.mxu0 0.0
    %66 = vmatpush1.msra.mxu0 0.0
    %67 = vmatprep.subr.mxu0 0.0
    %68 = vmatpush1.msra.mxu0 0.0
    %69 = vmatprep.subr.mxu0 0.0
    %70 = vmatpush1.msra.mxu0 0.0
    %71 = vmatprep.subr.mxu0 0.0
    %72 = vmatpush1.msra.mxu0 0.0
    %73 = vmatprep.subr.mxu0 0.0
    %74 = vmatpush1.msra.mxu0 0.0
    %75 = vmatprep.subr.mxu0 0.0
    %76 = vmatpush1.msra.mxu0 0.0
    %77 = vmatprep.subr.mxu0 0.0
    %78 = vmatpush1.msra.mxu0 0.0
    %79 = vmatprep.subr.mxu0 0.0
    %80 = vmatpush1.msra.mxu0 0.0
    %81 = vmatprep.subr.mxu0 0.0
    %82 = vmatpush1.msra.mxu0 0.0
    %83 = vmatprep.subr.mxu0 0.0
    %84 = vmatpush1.msra.mxu0 0.0
    %85 = vmatprep.subr.mxu0 0.0
    %86 = vmatpush1.msra.mxu0 %v46
    %87 = vmatprep.subr.mxu0 0.0
    %88 = vmatpush1.msra.mxu0 %v45
    %89 = vmatprep.subr.mxu0 0.0
    %90 = vmatpush1.msra.mxu0 %v44
    %91 = vmatprep.subr.mxu0 0.0
    %92 = vmatpush1.msra.mxu0 %v43
    %93 = vmatprep.subr.mxu0 0.0
    %94 = vmatpush2.msra.mxu0 0.0
    %95 = vmatprep.subr.mxu0 0.0
    %96 = vmatpush2.msra.mxu0 0.0
    %97 = vmatprep.subr.mxu0 0.0
    %98 = vmatpush2.msra.mxu0 0.0
    %99 = vmatprep.subr.mxu0 0.0
    %100 = vmatpush2.msra.mxu0 0.0
    %101 = vmatprep.subr.mxu0 0.0
    %102 = vmatpush2.msra.mxu0 0.0
    %103 = vmatprep.subr.mxu0 0.0
    %104 = vmatpush2.msra.mxu0 0.0
    %105 = vmatprep.subr.mxu0 0.0
    %106 = vmatpush2.msra.mxu0 0.0
    %107 = vmatprep.subr.mxu0 0.0
    %108 = vmatpush2.msra.mxu0 0.0
    %109 = vmatprep.subr.mxu0 0.0
    %110 = vmatpush2.msra.mxu0 0.0
    %111 = vmatprep.subr.mxu0 0.0
    %112 = vmatpush2.msra.mxu0 0.0
    %113 = vmatprep.subr.mxu0 0.0
    %114 = vmatpush2.msra.mxu0 0.0
    %115 = vmatprep.subr.mxu0 0.0
    %116 = vmatpush2.msra.mxu0 0.0
    %117 = vmatprep.subr.mxu0 0.0
    %118 = vmatpush2.msra.mxu0 0.0
    %119 = vmatprep.subr.mxu0 0.0
    %120 = vmatpush2.msra.mxu0 0.0
    %121 = vmatprep.subr.mxu0 0.0
    %122 = vmatpush2.msra.mxu0 0.0
    %123 = vmatprep.subr.mxu0 0.0
    %124 = vmatpush2.msra.mxu0 0.0
    %125 = vmatprep.mubr.f32.mxu0 0.0
    %126 = vmatmul.mubr.f32.gmra.mxu0 %v56
    %v127 = vpop.f32.mrf.mxu0
    %v128 = vadd.f32 %v52, %v127
    %v129 = vpop.f32.mrf.mxu0
    %130 = vmatprep.mubr.f32.mxu0 0.0
    %131 = vmatmul.mubr.f32.gmra.mxu0 %v59
    %v132 = vpop.f32.mrf.mxu0
    %v133 = vadd.f32 %v52, %v132
    %v134 = vpop.f32.mrf.mxu0
    %135 = vdwg.mxu0
    %v136 = vmax.f32 %v128, 0.0
    %v137 = vmax.f32 %v133, 0.0
    %v138 = vld [vmem:[%s2] sm:$0x1]
    %v140 = vlaneseq
    %v141 = vshrl.u32 %v140, 7
    %v142 = vsub.s32 0, %v141
    %v143 = vrot.slane %v138, %v142
    %v145 = vmul.f32 %v39, %v143
    %v146 = vmul.f32 %v40, %v143
    %v147 = vsel %vm54, %v145, 0.0
    %148 = vadd.xlane.f32.xlu0 %v147
    %v149 = vpop.xlane.xlu0 %148
    %v150 = vsel %vm54, %v146, 0.0
    %151 = vadd.xlane.f32.xlu0 %v150
    %v152 = vpop.xlane.xlu0 %151
    %s153 = sld [smem:[#allocation2]]
    %v154 = vstv %s153
    %v155 = vadd.f32 %v149, %v154
    %v156 = vadd.f32 %v152, %v154
    %v157 = vxor.u32 %v155, 2147483648
    %v158 = vxor.u32 %v156, 2147483648
    %v159 = vmul.f32 %v157, 1.442695
    %v160 = vpow.pop %v159
    %v161 = vmul.f32 %v158, 1.442695
    %v162 = vpow.pop %v161
    %v163 = vadd.f32 %v160, 1.0
    %v164 = vadd.f32 %v162, 1.0
    %v165 = vrcp.pop %v163
    %v166 = vmul.f32 1.0, %v165
    %v167 = vrcp.pop %v164
    %v168 = vmul.f32 1.0, %v167
    %v169 = vmul.f32 %v41, %v166
    %v170 = vmul.f32 %v42, %v168
    %172 = vset.pattern.permute.xlu0 0
    %173 = vperm.xlu0 %172, %v169
    %v174 = vpop.permute.xlu0 %173
    %177 = vset.pattern.permute.xlu0 0
    %178 = vperm.xlu0 %177, %v170
    %v179 = vpop.permute.xlu0 %178
    %v181 = vmul.f32 %v174, %v136
    %v182 = vmul.f32 %v179, %v137
    %v183 = vsub.f32 %v41, 1.0
    %v184 = vsub.f32 %v42, 1.0
    %v185 = vmul.f32 %v183, 1e+09
    %v186 = vmul.f32 %v184, 1e+09
    %188 = vset.pattern.permute.xlu0 0
    %189 = vperm.xlu0 %188, %v185
    %v190 = vpop.permute.xlu0 %189
    %193 = vset.pattern.permute.xlu0 0
    %194 = vperm.xlu0 %193, %v186
    %v195 = vpop.permute.xlu0 %194
    %v197 = vadd.f32 %v181, %v190
    %v198 = vadd.f32 %v182, %v195
    %vm199 = vcmask 7168
    %v200 = vsel %vm199, %v41, 0.0
    %v201 = vrot.slane %v200, 4
    %v202 = vadd.f32 %v200, %v201
    %v203 = vrot.slane %v202, 2
    %v204 = vadd.f32 %v202, %v203
    %v205 = vrot.slane %v204, 1
    %v206 = vadd.f32 %v204, %v205
    %v207 = vsel %vm199, %v42, 0.0
    %v208 = vrot.slane %v207, 4
    %v209 = vadd.f32 %v207, %v208
    %v210 = vrot.slane %v209, 2
    %v211 = vadd.f32 %v209, %v210
    %v212 = vrot.slane %v211, 1
    %v213 = vadd.f32 %v211, %v212
    %v214 = vrot.slane %v181, 4
    %v215 = vadd.f32 %v181, %v214
    %v216 = vrot.slane %v215, 2
    %v217 = vadd.f32 %v215, %v216
    %v218 = vrot.slane %v217, 1
    %v219 = vadd.f32 %v217, %v218
    %v220 = vrot.slane %v182, 4
    %v221 = vadd.f32 %v182, %v220
    %v222 = vrot.slane %v221, 2
    %v223 = vadd.f32 %v221, %v222
    %v224 = vrot.slane %v223, 1
    %v225 = vadd.f32 %v223, %v224
    %v226 = vrcp.pop %v206
    %v227 = vmul.f32 1.0, %v226
    %v228 = vrcp.pop %v213
    %v229 = vmul.f32 1.0, %v228
    %231 = vset.pattern.permute.xlu0 0
    %232 = vperm.xlu0 %231, %v227
    %v233 = vpop.permute.xlu0 %232
    %236 = vset.pattern.permute.xlu0 0
    %237 = vperm.xlu0 %236, %v229
    %v238 = vpop.permute.xlu0 %237
    %v240 = vmul.f32 %v219, %v233
    %v241 = vmul.f32 %v225, %v238
    %v242 = vrot.slane %v197, 4
    %v243 = vmax.f32 %v197, %v242
    %v244 = vrot.slane %v243, 2
    %v245 = vmax.f32 %v243, %v244
    %v246 = vrot.slane %v245, 1
    %v247 = vmax.f32 %v245, %v246
    %v248 = vrot.slane %v198, 4
    %v249 = vmax.f32 %v198, %v248
    %v250 = vrot.slane %v249, 2
    %v251 = vmax.f32 %v249, %v250
    %v252 = vrot.slane %v251, 1
    %v253 = vmax.f32 %v251, %v252
    %v254 = vadd.f32 %v240, %v247
    %v255 = vadd.f32 %v241, %v253
    %vm258 = vcmask 1041409
    %v259 = vsel %vm258, %v255, %v254
    %261 = vst [vmem:[#allocation6] sm:$0x3] %v259
    // Predicated region
    $region30: #{tpu_custom_call.1} parent=1 // pred_check
      _
    $region31: #{tpu_custom_call.1} parent=1 // pred_check_branch
      %263 = sbr.rel (0) target = $region33
    $region32: #{tpu_custom_call.1} parent=1 // pred_region
      %s265 = ssub.s32 32, 32
      %266 = vsyncadd [#allocation5], %s265
      %s268 = sshll.u32 [#allocation6], 4
      %s269 = int_to_ptr.vmem [resolvable:$true] %s268
      %271 = dma.vmem_to_hbm [thread:$0]  %s269, 32, %s6, [#allocation5]
    $region33: #{tpu_custom_call.1} parent=1 // pred_fallthru
      _
    // Predicated region
    $region34: #{tpu_custom_call.1} parent=1 // pred_check
      _
    $region35: #{tpu_custom_call.1} parent=1 // pred_check_branch
      %273 = sbr.rel (0) target = $region37
    $region36: #{tpu_custom_call.1} parent=1 // pred_region
      %274 = dma.done [#allocation5], 32
    $region37: #{tpu_custom_call.1} parent=1 // pred_fallthru
      _
    %275 = vsyncpa [#allocation4], 1
    %276 = vsyncpa [#allocation5], 1

</llo_original>
